<compile_context>
chip_gen: v5e
topology: v5e:2x2
jax: 0.10.0
libtpu: 0.0.40
codegen_flags: <defaults>
</compile_context>

<pallas_src>
import jax
import jax.numpy as jnp
from jax.experimental import pallas as pl
from jax.experimental.pallas import tpu as pltpu

EPS = 1e-5  # BatchNorm2d default eps


def _round_up(x, m):
    return (x + m - 1) // m * m


def _vmem_limit_bytes():
    # ~75% of physical VMEM: ~96 MiB on v5e/v6e (128 MiB), ~48 MiB on v7x (64 MiB).
    try:
        cap = pltpu.get_tpu_info().vmem_capacity_bytes
        return int(cap * 3 // 4)
    except Exception:
        return 64 * 1024 * 1024


def attention_early_fusion_multi_query(image_nchw, sk1_nchw, sk2_nchw, sk3_nchw,
                                       params, *, matmul_dtype=jnp.bfloat16,
                                       out_dtype=None, tile_hw=None,
                                       attention_via_mxu=None):
    """NCHW in / NCHW out. Hot path in two Pallas kernels, no transposes."""
    B, C, H, W = image_nchw.shape
    HW = H * W
    f32 = jnp.float32
    out_dtype = matmul_dtype if out_dtype is None else out_dtype
    if attention_via_mxu is None:
        attention_via_mxu = C >= 128

    # HW tiling: lane-aligned tiles; HW padded up to a tile multiple.
    if tile_hw is None:
        tile_hw = min(_round_up(HW, 128), 2048)
    else:
        tile_hw = _round_up(tile_hw, 128)
    HWp = _round_up(HW, tile_hw)
    n_t = HWp // tile_hw
    needs_mask = HWp != HW

    feat_bytes = jnp.dtype(matmul_dtype).itemsize
    out_bytes = jnp.dtype(out_dtype).itemsize

    # ---- wrapper-side layout: (B, C, HWp) feats; sketches stacked (B, 3, C, HWp)
    def _prep(x):
        x = x.reshape(B, C, HW)
        if needs_mask:
            x = jnp.pad(x, ((0, 0), (0, 0), (0, HWp - HW)))
        return x.astype(matmul_dtype)

    img = _prep(image_nchw)
    sk_stack = jnp.stack([_prep(sk1_nchw), _prep(sk2_nchw), _prep(sk3_nchw)], axis=1)

    # ---- fold conv1 bias + BatchNorm(eval, running stats) into conv1 ----
    def fold(w1, b1, gamma, beta, mean, var):
        s = gamma * jax.lax.rsqrt(var + EPS)
        w_f = (w1 * s[:, None]).astype(matmul_dtype)                 # (C, C)
        b_f = ((b1 - mean) * s + beta)[:, None].astype(f32)          # (C, 1)
        return w_f, b_f

    wi1_f, bi1_f = fold(params["wi1"], params["bi1"], params["gi"],
                        params["bti"], params["mi"], params["vi"])
    ws1_f, bs1_f = fold(params["ws1"], params["bs1"], params["gs"],
                        params["bts"], params["ms"], params["vs"])
    wi2 = params["wi2"].astype(matmul_dtype)
    ws2 = params["ws2"].astype(matmul_dtype)
    wsf = params["wsf"]                                              # (C, 3C)
    wsf_stacked = jnp.stack([wsf[:, 0:C], wsf[:, C:2 * C], wsf[:, 2 * C:3 * C]],
                            axis=0).astype(matmul_dtype)             # (3, C, C)
    op = jnp.stack([params["op_w"], params["op_b"]]).astype(f32)     # (2,) -> SMEM

    # ------------------------------------------------------------------
    # Kernel 1: theta_sketch running per-channel max + sketch_fusion.
    # grid = (B, n_t); HW axis is the reduction (running max) -> arbitrary.
    # ------------------------------------------------------------------
    def _sketch_kernel(sk_ref, ws1_ref, bs1_ref, ws2_ref, wsf_ref,
                       sk_out_ref, smax_ref):
        t = pl.program_id(1)

        @pl.when(t == 0)
        def _():
            smax_ref[...] = jnp.full((C, 3), -jnp.inf, dtype=f32)

        if needs_mask:
            lane = jax.lax.broadcasted_iota(jnp.int32, (C, tile_hw), 1) + t * tile_hw
            valid = lane < HW

        sketches = None
        for i in range(3):                       # unrolled: one (C,THW) temp at a time
            sk_i = sk_ref[i]                                               # (C, THW)
            # theta_sketch: (conv1 folded with BN) -> ReLU -> conv2
            h = jnp.dot(ws1_ref[...], sk_i, preferred_element_type=f32)
            h = jnp.maximum(h + bs1_ref[...], 0.0).astype(sk_i.dtype)
            sf = jnp.dot(ws2_ref[...], h, preferred_element_type=f32)      # (C, THW)
            if needs_mask:
                sf = jnp.where(valid, sf, -jnp.inf)   # padded lanes must not win the max
            tmax = jnp.max(sf, axis=1, keepdims=True)                      # (C, 1)
            smax_ref[:, i:i + 1] = jnp.maximum(smax_ref[:, i:i + 1], tmax)
            # sketch_fusion: 1x1 conv on the channel-concat of RAW sketches.
            # TODO(synk): when C % 8 == 0, a single (C,3C)@(3C,THW) dot via a
            #             leading-dim reshape of sk_ref would fuse these 3 dots.
            part = jnp.dot(wsf_ref[i], sk_i, preferred_element_type=f32)
            sketches = part if sketches is None else sketches + part
        sk_out_ref[...] = sketches.astype(sk_out_ref.dtype)

    # ------------------------------------------------------------------
    # Kernel 2: theta_image + attention maps + op + attention_feats.
    # grid = (B, n_t); fully per-tile -> both axes parallel (v7x 2 TCs).
    # ------------------------------------------------------------------
    def _image_kernel(img_ref, smax_ref, wi1_ref, bi1_ref, wi2_ref, op_ref,
                      att_ref, maps_ref):
        img = img_ref[...]                                                 # (C, THW)
        h = jnp.dot(wi1_ref[...], img, preferred_element_type=f32)
        h = jnp.maximum(h + bi1_ref[...], 0.0).astype(img.dtype)
        img_f = jnp.dot(wi2_ref[...], h, preferred_element_type=f32)      # (C, THW)

        smax = smax_ref[...]                                               # (C, 3) f32
        if attention_via_mxu:
            raw = jnp.dot(smax.T, img_f, preferred_element_type=f32)      # (3, THW)
        else:
            raw = jnp.concatenate(
                [jnp.sum(img_f * smax[:, i:i + 1], axis=0, keepdims=True)
                 for i in range(3)], axis=0)                               # (3, THW)

        op_w = op_ref[0]            # scalar reads from SMEM
        op_b = op_ref[1]
        maps_ref[...] = (raw * op_w + op_b).astype(maps_ref.dtype)
        scale = (jnp.sum(raw, axis=0, keepdims=True) * (op_w / 3.0) + op_b) * (1.0 / 256.0)
        att_ref[...] = (img.astype(f32) * scale).astype(att_ref.dtype)

    # ---- specs -------------------------------------------------------
    def _const_spec(shape):
        nd = len(shape)
        return pl.BlockSpec(shape, lambda b, t, _nd=nd: (0,) * _nd)

    feat_spec = pl.BlockSpec((pl.Squeezed(), C, tile_hw), lambda b, t: (b, 0, t))
    smax_spec = pl.BlockSpec((pl.Squeezed(), C, 3), lambda b, t: (b, 0, 0))
    maps_spec = pl.BlockSpec((pl.Squeezed(), 3, tile_hw), lambda b, t: (b, 0, t))
    sk_stack_spec = pl.BlockSpec((pl.Squeezed(), 3, C, tile_hw), lambda b, t: (b, 0, 0, t))

    vmem_limit = _vmem_limit_bytes()

    # ---- kernel 1 call ----
    sketch_cost = pl.CostEstimate(
        flops=int(2 * 9 * B * HW * C * C),                           # MAC = 2 flops
        transcendentals=0,
        bytes_accessed=int(B * HWp * C * (3 * feat_bytes + out_bytes)
                           + B * 3 * C * 4 + 5 * C * C * feat_bytes),
    )
    sketches_out, smax = pl.pallas_call(
        _sketch_kernel,
        out_shape=(jax.ShapeDtypeStruct((B, C, HWp), out_dtype),     # sketches
                   jax.ShapeDtypeStruct((B, C, 3), jnp.float32)),    # per-sketch smax
        grid_spec=pltpu.PrefetchScalarGridSpec(
            num_scalar_prefetch=0,
            grid=(B, n_t),
            in_specs=[sk_stack_spec,
                      _const_spec((C, C)), _const_spec((C, 1)),
                      _const_spec((C, C)), _const_spec((3, C, C))],
            out_specs=[feat_spec, smax_spec]),
        compiler_params=pltpu.CompilerParams(
            # TODO(synk): at B == 1 on v7x the running-max reduction keeps
            #             kernel 1 on a single TC; a cross-core max merge would lift that.
            dimension_semantics=("parallel", "arbitrary"),
            vmem_limit_bytes=vmem_limit),
        cost_estimate=sketch_cost,
    )(sk_stack, ws1_f, bs1_f, ws2, wsf_stacked)

    # ---- kernel 2 call ----
    image_cost = pl.CostEstimate(
        flops=int(2 * B * HW * (2 * C * C + 3 * C)),
        transcendentals=0,
        bytes_accessed=int(B * HWp * C * (feat_bytes + out_bytes)
                           + B * HWp * 3 * 4 + B * 3 * C * 4 + 2 * C * C * feat_bytes),
    )
    att, maps = pl.pallas_call(
        _image_kernel,
        out_shape=(jax.ShapeDtypeStruct((B, C, HWp), out_dtype),     # attention_feats
                   jax.ShapeDtypeStruct((B, 3, HWp), jnp.float32)),  # packed attention maps
        grid_spec=pltpu.PrefetchScalarGridSpec(
            num_scalar_prefetch=0,
            grid=(B, n_t),
            in_specs=[feat_spec, smax_spec,
                      _const_spec((C, C)), _const_spec((C, 1)), _const_spec((C, C)),
                      pl.BlockSpec(memory_space=pltpu.MemorySpace.SMEM)],
            out_specs=[feat_spec, maps_spec]),
        compiler_params=pltpu.CompilerParams(
            dimension_semantics=("parallel", "parallel"),
            vmem_limit_bytes=vmem_limit),
        cost_estimate=image_cost,
    )(img, smax, wi1_f, bi1_f, wi2, op)

    def _unpad(x):
        return x[:, :, :HW] if needs_mask else x

    attention_feats = _unpad(att).reshape(B, C, H, W)
    sketches = _unpad(sketches_out).reshape(B, C, H, W)
    final_atten_map = _unpad(maps).reshape(B, 3, H, W)
    map1 = final_atten_map[:, 0:1]
    map2 = final_atten_map[:, 1:2]
    map3 = final_atten_map[:, 2:3]
    # Matches torch return: (attention_feats, sketches, [map1, feats2, feats3, final])
    return attention_feats, sketches, [map1, map2, map3, final_atten_map]


def init_params(key, C):
    """Deterministic synthetic parameters (shapes from the module's __init__)."""
    ks = jax.random.split(key, 16)
    n = lambda k, s, sc=0.2: sc * jax.random.normal(k, s, jnp.float32)
    p = {
        # theta_image: conv1 (C,C)+bias, BN(C), conv2 (C,C)
        "wi1": n(ks[0], (C, C)), "bi1": n(ks[1], (C,)),
        "gi": 1.0 + 0.1 * jax.random.normal(ks[2], (C,), jnp.float32),
        "bti": 0.1 * jax.random.normal(ks[3], (C,), jnp.float32),
        "mi": 0.1 * jax.random.normal(ks[4], (C,), jnp.float32),
        "vi": jax.random.uniform(ks[5], (C,), jnp.float32, 0.5, 1.5),
        "wi2": n(ks[6], (C, C)),
        # theta_sketch
        "ws1": n(ks[7], (C, C)), "bs1": n(ks[8], (C,)),
        "gs": 1.0 + 0.1 * jax.random.normal(ks[9], (C,), jnp.float32),
        "bts": 0.1 * jax.random.normal(ks[10], (C,), jnp.float32),
        "ms": 0.1 * jax.random.normal(ks[11], (C,), jnp.float32),
        "vs": jax.random.uniform(ks[12], (C,), jnp.float32, 0.5, 1.5),
        "ws2": n(ks[13], (C, C)),
        # sketch_fusion: (out=C, in=3C)
        "wsf": n(ks[14], (C, 3 * C)),
    }
    opwb = n(ks[15], (2,))
    p["op_w"] = opwb[0]
    p["op_b"] = opwb[1]
    return p


def _reference(image, sk1, sk2, sk3, p):
    """Pure-JAX reference of the forward pass (channels-last internally)."""
    B, C, H, W = image.shape
    HW = H * W
    flat = lambda x: jnp.transpose(x, (0, 2, 3, 1)).reshape(B, HW, C)
    img, s1, s2, s3 = flat(image), flat(sk1), flat(sk2), flat(sk3)

    def theta(x, w1, b1, g, bt, m, v, w2):
        h = jnp.einsum("bpc,dc->bpd", x, w1) + b1
        h = (h - m) * jax.lax.rsqrt(v + EPS) * g + bt
        h = jnp.maximum(h, 0.0)
        return jnp.einsum("bpc,dc->bpd", h, w2)

    imgf = theta(img, p["wi1"], p["bi1"], p["gi"], p["bti"], p["mi"], p["vi"], p["wi2"])
    s1f = theta(s1, p["ws1"], p["bs1"], p["gs"], p["bts"], p["ms"], p["vs"], p["ws2"])
    s2f = theta(s2, p["ws1"], p["bs1"], p["gs"], p["bts"], p["ms"], p["vs"], p["ws2"])
    s3f = theta(s3, p["ws1"], p["bs1"], p["gs"], p["bts"], p["ms"], p["vs"], p["ws2"])
    sketches = jnp.einsum("bpc,dc->bpd", jnp.concatenate([s1, s2, s3], -1), p["wsf"])

    def att(sf):
        smax = jnp.max(sf, axis=1)                              # (B, C)
        a = jnp.einsum("bpc,bc->bp", imgf, smax)[..., None]     # (B, HW, 1)
        return a * p["op_w"] + p["op_b"]

    a1, a2, a3 = att(s1f), att(s2f), att(s3f)
    attf = img * ((a1 + a2 + a3) / 3.0 / 256.0)
    nchw = lambda x: jnp.transpose(x, (0, 2, 1)).reshape(B, x.shape[-1], H, W)
    return nchw(attf), nchw(sketches), [nchw(a1), nchw(a2), nchw(a3)]


if __name__ == "__main__":
    key = jax.random.PRNGKey(0)
    kx, kp = jax.random.split(key)
    B, C, H, W = 2, 8, 16, 16
    k0, k1, k2, k3 = jax.random.split(kx, 4)
    image = jax.random.normal(k0, (B, C, H, W), jnp.float32)
    sk1 = jax.random.normal(k1, (B, C, H, W), jnp.float32)
    sk2 = jax.random.normal(k2, (B, C, H, W), jnp.float32)
    sk3 = jax.random.normal(k3, (B, C, H, W), jnp.float32)
    params = init_params(kp, C)

    ratt, rsk, rmaps = _reference(image, sk1, sk2, sk3, params)

    # ---- f32 path: tight check against the pure-JAX reference ----
    att, sketches, maps = attention_early_fusion_multi_query(
        image, sk1, sk2, sk3, params, matmul_dtype=jnp.float32, out_dtype=jnp.float32)
    jax.block_until_ready((att, sketches, maps))
    assert jnp.allclose(att, ratt, atol=1e-3, rtol=1e-3)
    assert jnp.allclose(sketches, rsk, atol=1e-3, rtol=1e-3)
    for m, rm in zip(maps[:3], rmaps):
        assert jnp.allclose(m, rm, atol=1e-3, rtol=1e-3)
    assert maps[3].shape == (B, 3, H, W)

    # ---- default bf16 in/out path (f32 accumulate): numeric sanity check ----
    att_b, sketches_b, maps_b = attention_early_fusion_multi_query(
        image, sk1, sk2, sk3, params)
    jax.block_until_ready((att_b, sketches_b, maps_b))
    assert att_b.dtype == jnp.bfloat16 and sketches_b.dtype == jnp.bfloat16
    assert jnp.allclose(att_b.astype(jnp.float32), ratt, atol=3e-2, rtol=1e-1)
    assert jnp.allclose(sketches_b.astype(jnp.float32), rsk, atol=3e-2, rtol=1e-1)
    for m, rm in zip(maps_b[:3], rmaps):
        assert jnp.allclose(m.astype(jnp.float32), rm, atol=3e-2, rtol=1e-1)

    # ---- non-128-multiple HW: multi-tile running max, -inf masking, MXU path ----
    B2, H2, W2 = 2, 12, 11    # HW = 132 -> two 128-lane tiles, 124 padded lanes
    j0, j1, j2, j3 = jax.random.split(jax.random.PRNGKey(1), 4)
    image2 = jax.random.normal(j0, (B2, C, H2, W2), jnp.float32)
    sk1b = jax.random.normal(j1, (B2, C, H2, W2), jnp.float32)
    sk2b = jax.random.normal(j2, (B2, C, H2, W2), jnp.float32)
    sk3b = jax.random.normal(j3, (B2, C, H2, W2), jnp.float32)
    att2, sketches2, maps2 = attention_early_fusion_multi_query(
        image2, sk1b, sk2b, sk3b, params,
        matmul_dtype=jnp.float32, out_dtype=jnp.float32,
        tile_hw=128, attention_via_mxu=True)
    jax.block_until_ready((att2, sketches2, maps2))
    ratt2, rsk2, rmaps2 = _reference(image2, sk1b, sk2b, sk3b, params)
    assert jnp.allclose(att2, ratt2, atol=2e-3, rtol=2e-3)
    assert jnp.allclose(sketches2, rsk2, atol=2e-3, rtol=2e-3)
    for m, rm in zip(maps2[:3], rmaps2):
        assert jnp.allclose(m, rm, atol=2e-3, rtol=2e-3)

    print("KERNEL_OK")
</pallas_src>

<mosaic_0001>
module attributes {stable_mosaic.version = 11 : i64} {
  func.func @_sketch_kernel(%arg0: i32, %arg1: i32, %arg2: memref<1x3x8x256xf32, #tpu.memory_space<vmem>>, %arg3: memref<8x8xf32, #tpu.memory_space<vmem>>, %arg4: memref<8x1xf32, #tpu.memory_space<vmem>>, %arg5: memref<8x8xf32, #tpu.memory_space<vmem>>, %arg6: memref<3x8x8xf32, #tpu.memory_space<vmem>>, %arg7: memref<1x8x256xf32, #tpu.memory_space<vmem>>, %arg8: memref<1x8x3xf32, #tpu.memory_space<vmem>>) attributes {dimension_semantics = [#tpu.dimension_semantics<parallel>, #tpu.dimension_semantics<arbitrary>], iteration_bounds = array<i64: 2, 1>, scalar_prefetch = 0 : i64, scratch_operands = 0 : i64, tpu.core_type = #tpu.core_type<tc>, window_params = [{transform_indices = @transform_0, window_bounds = array<i64: 1, 3, 8, 256>}, {pipeline_mode = #tpu.pipeline_mode<synchronous>, transform_indices = @transform_1, window_bounds = array<i64: 8, 8>}, {pipeline_mode = #tpu.pipeline_mode<synchronous>, transform_indices = @transform_2, window_bounds = array<i64: 8, 1>}, {pipeline_mode = #tpu.pipeline_mode<synchronous>, transform_indices = @transform_3, window_bounds = array<i64: 8, 8>}, {pipeline_mode = #tpu.pipeline_mode<synchronous>, transform_indices = @transform_4, window_bounds = array<i64: 3, 8, 8>}, {transform_indices = @transform_5, window_bounds = array<i64: 1, 8, 256>}, {transform_indices = @transform_6, window_bounds = array<i64: 1, 8, 3>}]} {
    %c0_i32 = arith.constant 0 : i32
    %0 = arith.cmpi eq, %arg1, %c0_i32 : i32
    %1 = arith.extui %0 : i1 to i32
    %c0_i32_0 = arith.constant 0 : i32
    %2 = arith.cmpi ne, %1, %c0_i32_0 : i32
    scf.if %2 {
      %cst_72 = arith.constant 0xFF800000 : f32
      %74 = vector.broadcast %cst_72 : f32 to vector<8x3xf32>
      %c0_73 = arith.constant 0 : index
      %c0_74 = arith.constant 0 : index
      %c0_75 = arith.constant 0 : index
      %75 = vector.load %arg8[%c0_73, %c0_74, %c0_75] : memref<1x8x3xf32, #tpu.memory_space<vmem>>, vector<1x8x3xf32>
      %76 = vector.shape_cast %75 : vector<1x8x3xf32> to vector<8x3xf32>
      %77 = vector.shape_cast %74 : vector<8x3xf32> to vector<1x8x3xf32>
      tpu.vector_store %arg8[%c0_73, %c0_74, %c0_75], %77 {strides = array<i32>} : memref<1x8x3xf32, #tpu.memory_space<vmem>>, vector<1x8x3xf32>,
    } else {
    }
    %c0 = arith.constant 0 : index
    %c0_1 = arith.constant 0 : index
    %c0_2 = arith.constant 0 : index
    %c0_3 = arith.constant 0 : index
    %3 = vector.load %arg2[%c0, %c0_1, %c0_2, %c0_3] : memref<1x3x8x256xf32, #tpu.memory_space<vmem>>, vector<1x1x8x256xf32>
    %4 = vector.shape_cast %3 : vector<1x1x8x256xf32> to vector<8x256xf32>
    %c0_4 = arith.constant 0 : index
    %c0_5 = arith.constant 0 : index
    %5 = vector.load %arg3[%c0_4, %c0_5] : memref<8x8xf32, #tpu.memory_space<vmem>>, vector<8x8xf32>
    %cst = arith.constant dense<0.000000e+00> : vector<8x256xf32>
    %6 = tpu.matmul %5, %4, %cst {dimension_numbers = #tpu.dot_dimension_numbers<[1], [0], [0], [1], [0, 0, 1, 1], [], []>} : vector<8x8xf32>, vector<8x256xf32>, vector<8x256xf32> -> vector<8x256xf32>
    %c0_6 = arith.constant 0 : index
    %c0_7 = arith.constant 0 : index
    %7 = vector.load %arg4[%c0_6, %c0_7] : memref<8x1xf32, #tpu.memory_space<vmem>>, vector<8x1xf32>
    %8 = vector.broadcast %7 : vector<8x1xf32> to vector<8x256xf32>
    %9 = arith.addf %6, %8 : vector<8x256xf32>
    %cst_8 = arith.constant 0.000000e+00 : f32
    %10 = vector.broadcast %cst_8 : f32 to vector<8x256xf32>
    %11 = arith.maximumf %9, %10 : vector<8x256xf32>
    %c0_9 = arith.constant 0 : index
    %c0_10 = arith.constant 0 : index
    %12 = vector.load %arg5[%c0_9, %c0_10] : memref<8x8xf32, #tpu.memory_space<vmem>>, vector<8x8xf32>
    %cst_11 = arith.constant dense<0.000000e+00> : vector<8x256xf32>
    %13 = tpu.matmul %12, %11, %cst_11 {dimension_numbers = #tpu.dot_dimension_numbers<[1], [0], [0], [1], [0, 0, 1, 1], [], []>} : vector<8x8xf32>, vector<8x256xf32>, vector<8x256xf32> -> vector<8x256xf32>
    %cst_12 = arith.constant dense<0xFF800000> : vector<8xf32>
    %14 = vector.multi_reduction <maximumf>, %13, %cst_12 [1] : vector<8x256xf32> to vector<8xf32>
    %15 = vector.shape_cast %14 : vector<8xf32> to vector<8x1xf32>
    %c0_13 = arith.constant 0 : index
    %c0_14 = arith.constant 0 : index
    %c0_15 = arith.constant 0 : index
    %16 = vector.load %arg8[%c0_13, %c0_14, %c0_15] : memref<1x8x3xf32, #tpu.memory_space<vmem>>, vector<1x8x1xf32>
    %17 = vector.shape_cast %16 : vector<1x8x1xf32> to vector<8x1xf32>
    %18 = arith.maximumf %17, %15 : vector<8x1xf32>
    %c0_16 = arith.constant 0 : index
    %c0_17 = arith.constant 0 : index
    %c0_18 = arith.constant 0 : index
    %19 = vector.load %arg8[%c0_16, %c0_17, %c0_18] : memref<1x8x3xf32, #tpu.memory_space<vmem>>, vector<1x8x1xf32>
    %20 = vector.shape_cast %19 : vector<1x8x1xf32> to vector<8x1xf32>
    %21 = vector.shape_cast %18 : vector<8x1xf32> to vector<1x8x1xf32>
    tpu.vector_store %arg8[%c0_16, %c0_17, %c0_18], %21 {strides = array<i32>} : memref<1x8x3xf32, #tpu.memory_space<vmem>>, vector<1x8x1xf32>,
    %c0_19 = arith.constant 0 : index
    %c0_20 = arith.constant 0 : index
    %c0_21 = arith.constant 0 : index
    %22 = vector.load %arg6[%c0_19, %c0_20, %c0_21] : memref<3x8x8xf32, #tpu.memory_space<vmem>>, vector<1x8x8xf32>
    %23 = vector.shape_cast %22 : vector<1x8x8xf32> to vector<8x8xf32>
    %cst_22 = arith.constant dense<0.000000e+00> : vector<8x256xf32>
    %24 = tpu.matmul %23, %4, %cst_22 {dimension_numbers = #tpu.dot_dimension_numbers<[1], [0], [0], [1], [0, 0, 1, 1], [], []>} : vector<8x8xf32>, vector<8x256xf32>, vector<8x256xf32> -> vector<8x256xf32>
    %c0_23 = arith.constant 0 : index
    %c1 = arith.constant 1 : index
    %c0_24 = arith.constant 0 : index
    %c0_25 = arith.constant 0 : index
    %25 = vector.load %arg2[%c0_23, %c1, %c0_24, %c0_25] : memref<1x3x8x256xf32, #tpu.memory_space<vmem>>, vector<1x1x8x256xf32>
    %26 = vector.shape_cast %25 : vector<1x1x8x256xf32> to vector<8x256xf32>
    %c0_26 = arith.constant 0 : index
    %c0_27 = arith.constant 0 : index
    %27 = vector.load %arg3[%c0_26, %c0_27] : memref<8x8xf32, #tpu.memory_space<vmem>>, vector<8x8xf32>
    %cst_28 = arith.constant dense<0.000000e+00> : vector<8x256xf32>
    %28 = tpu.matmul %27, %26, %cst_28 {dimension_numbers = #tpu.dot_dimension_numbers<[1], [0], [0], [1], [0, 0, 1, 1], [], []>} : vector<8x8xf32>, vector<8x256xf32>, vector<8x256xf32> -> vector<8x256xf32>
    %c0_29 = arith.constant 0 : index
    %c0_30 = arith.constant 0 : index
    %29 = vector.load %arg4[%c0_29, %c0_30] : memref<8x1xf32, #tpu.memory_space<vmem>>, vector<8x1xf32>
    %30 = vector.broadcast %29 : vector<8x1xf32> to vector<8x256xf32>
    %31 = arith.addf %28, %30 : vector<8x256xf32>
    %cst_31 = arith.constant 0.000000e+00 : f32
    %32 = vector.broadcast %cst_31 : f32 to vector<8x256xf32>
    %33 = arith.maximumf %31, %32 : vector<8x256xf32>
    %c0_32 = arith.constant 0 : index
    %c0_33 = arith.constant 0 : index
    %34 = vector.load %arg5[%c0_32, %c0_33] : memref<8x8xf32, #tpu.memory_space<vmem>>, vector<8x8xf32>
    %cst_34 = arith.constant dense<0.000000e+00> : vector<8x256xf32>
    %35 = tpu.matmul %34, %33, %cst_34 {dimension_numbers = #tpu.dot_dimension_numbers<[1], [0], [0], [1], [0, 0, 1, 1], [], []>} : vector<8x8xf32>, vector<8x256xf32>, vector<8x256xf32> -> vector<8x256xf32>
    %cst_35 = arith.constant dense<0xFF800000> : vector<8xf32>
    %36 = vector.multi_reduction <maximumf>, %35, %cst_35 [1] : vector<8x256xf32> to vector<8xf32>
    %37 = vector.shape_cast %36 : vector<8xf32> to vector<8x1xf32>
    %c0_36 = arith.constant 0 : index
    %c0_37 = arith.constant 0 : index
    %c1_38 = arith.constant 1 : index
    %38 = vector.load %arg8[%c0_36, %c0_37, %c1_38] : memref<1x8x3xf32, #tpu.memory_space<vmem>>, vector<1x8x1xf32>
    %39 = vector.shape_cast %38 : vector<1x8x1xf32> to vector<8x1xf32>
    %40 = arith.maximumf %39, %37 : vector<8x1xf32>
    %c0_39 = arith.constant 0 : index
    %c0_40 = arith.constant 0 : index
    %c1_41 = arith.constant 1 : index
    %41 = vector.load %arg8[%c0_39, %c0_40, %c1_41] : memref<1x8x3xf32, #tpu.memory_space<vmem>>, vector<1x8x1xf32>
    %42 = vector.shape_cast %41 : vector<1x8x1xf32> to vector<8x1xf32>
    %43 = vector.shape_cast %40 : vector<8x1xf32> to vector<1x8x1xf32>
    tpu.vector_store %arg8[%c0_39, %c0_40, %c1_41], %43 {strides = array<i32>} : memref<1x8x3xf32, #tpu.memory_space<vmem>>, vector<1x8x1xf32>,
    %c1_42 = arith.constant 1 : index
    %c0_43 = arith.constant 0 : index
    %c0_44 = arith.constant 0 : index
    %44 = vector.load %arg6[%c1_42, %c0_43, %c0_44] : memref<3x8x8xf32, #tpu.memory_space<vmem>>, vector<1x8x8xf32>
    %45 = vector.shape_cast %44 : vector<1x8x8xf32> to vector<8x8xf32>
    %cst_45 = arith.constant dense<0.000000e+00> : vector<8x256xf32>
    %46 = tpu.matmul %45, %26, %cst_45 {dimension_numbers = #tpu.dot_dimension_numbers<[1], [0], [0], [1], [0, 0, 1, 1], [], []>} : vector<8x8xf32>, vector<8x256xf32>, vector<8x256xf32> -> vector<8x256xf32>
    %47 = arith.addf %24, %46 : vector<8x256xf32>
    %c0_46 = arith.constant 0 : index
    %c2 = arith.constant 2 : index
    %c0_47 = arith.constant 0 : index
    %c0_48 = arith.constant 0 : index
    %48 = vector.load %arg2[%c0_46, %c2, %c0_47, %c0_48] : memref<1x3x8x256xf32, #tpu.memory_space<vmem>>, vector<1x1x8x256xf32>
    %49 = vector.shape_cast %48 : vector<1x1x8x256xf32> to vector<8x256xf32>
    %c0_49 = arith.constant 0 : index
    %c0_50 = arith.constant 0 : index
    %50 = vector.load %arg3[%c0_49, %c0_50] : memref<8x8xf32, #tpu.memory_space<vmem>>, vector<8x8xf32>
    %cst_51 = arith.constant dense<0.000000e+00> : vector<8x256xf32>
    %51 = tpu.matmul %50, %49, %cst_51 {dimension_numbers = #tpu.dot_dimension_numbers<[1], [0], [0], [1], [0, 0, 1, 1], [], []>} : vector<8x8xf32>, vector<8x256xf32>, vector<8x256xf32> -> vector<8x256xf32>
    %c0_52 = arith.constant 0 : index
    %c0_53 = arith.constant 0 : index
    %52 = vector.load %arg4[%c0_52, %c0_53] : memref<8x1xf32, #tpu.memory_space<vmem>>, vector<8x1xf32>
    %53 = vector.broadcast %52 : vector<8x1xf32> to vector<8x256xf32>
    %54 = arith.addf %51, %53 : vector<8x256xf32>
    %cst_54 = arith.constant 0.000000e+00 : f32
    %55 = vector.broadcast %cst_54 : f32 to vector<8x256xf32>
    %56 = arith.maximumf %54, %55 : vector<8x256xf32>
    %c0_55 = arith.constant 0 : index
    %c0_56 = arith.constant 0 : index
    %57 = vector.load %arg5[%c0_55, %c0_56] : memref<8x8xf32, #tpu.memory_space<vmem>>, vector<8x8xf32>
    %cst_57 = arith.constant dense<0.000000e+00> : vector<8x256xf32>
    %58 = tpu.matmul %57, %56, %cst_57 {dimension_numbers = #tpu.dot_dimension_numbers<[1], [0], [0], [1], [0, 0, 1, 1], [], []>} : vector<8x8xf32>, vector<8x256xf32>, vector<8x256xf32> -> vector<8x256xf32>
    %cst_58 = arith.constant dense<0xFF800000> : vector<8xf32>
    %59 = vector.multi_reduction <maximumf>, %58, %cst_58 [1] : vector<8x256xf32> to vector<8xf32>
    %60 = vector.shape_cast %59 : vector<8xf32> to vector<8x1xf32>
    %c0_59 = arith.constant 0 : index
    %c0_60 = arith.constant 0 : index
    %c2_61 = arith.constant 2 : index
    %61 = vector.load %arg8[%c0_59, %c0_60, %c2_61] : memref<1x8x3xf32, #tpu.memory_space<vmem>>, vector<1x8x1xf32>
    %62 = vector.shape_cast %61 : vector<1x8x1xf32> to vector<8x1xf32>
    %63 = arith.maximumf %62, %60 : vector<8x1xf32>
    %c0_62 = arith.constant 0 : index
    %c0_63 = arith.constant 0 : index
    %c2_64 = arith.constant 2 : index
    %64 = vector.load %arg8[%c0_62, %c0_63, %c2_64] : memref<1x8x3xf32, #tpu.memory_space<vmem>>, vector<1x8x1xf32>
    %65 = vector.shape_cast %64 : vector<1x8x1xf32> to vector<8x1xf32>
    %66 = vector.shape_cast %63 : vector<8x1xf32> to vector<1x8x1xf32>
    tpu.vector_store %arg8[%c0_62, %c0_63, %c2_64], %66 {strides = array<i32>} : memref<1x8x3xf32, #tpu.memory_space<vmem>>, vector<1x8x1xf32>,
    %c2_65 = arith.constant 2 : index
    %c0_66 = arith.constant 0 : index
    %c0_67 = arith.constant 0 : index
    %67 = vector.load %arg6[%c2_65, %c0_66, %c0_67] : memref<3x8x8xf32, #tpu.memory_space<vmem>>, vector<1x8x8xf32>
    %68 = vector.shape_cast %67 : vector<1x8x8xf32> to vector<8x8xf32>
    %cst_68 = arith.constant dense<0.000000e+00> : vector<8x256xf32>
    %69 = tpu.matmul %68, %49, %cst_68 {dimension_numbers = #tpu.dot_dimension_numbers<[1], [0], [0], [1], [0, 0, 1, 1], [], []>} : vector<8x8xf32>, vector<8x256xf32>, vector<8x256xf32> -> vector<8x256xf32>
    %70 = arith.addf %47, %69 : vector<8x256xf32>
    %c0_69 = arith.constant 0 : index
    %c0_70 = arith.constant 0 : index
    %c0_71 = arith.constant 0 : index
    %71 = vector.load %arg7[%c0_69, %c0_70, %c0_71] : memref<1x8x256xf32, #tpu.memory_space<vmem>>, vector<1x8x256xf32>
    %72 = vector.shape_cast %71 : vector<1x8x256xf32> to vector<8x256xf32>
    %73 = vector.shape_cast %70 : vector<8x256xf32> to vector<1x8x256xf32>
    tpu.vector_store %arg7[%c0_69, %c0_70, %c0_71], %73 {strides = array<i32>} : memref<1x8x256xf32, #tpu.memory_space<vmem>>, vector<1x8x256xf32>,
    return
  }
  func.func @transform_0(%arg0: i32, %arg1: i32) -> (i32, i32, i32, i32) {
    %c0_i32 = arith.constant 0 : i32
    %c0_i32_0 = arith.constant 0 : i32
    %c0_i32_1 = arith.constant 0 : i32
    return %arg0, %c0_i32, %c0_i32_0, %arg1 : i32, i32, i32, i32
  }
  func.func @transform_1(%arg0: i32, %arg1: i32) -> (i32, i32) {
    %c0_i32 = arith.constant 0 : i32
    %c0_i32_0 = arith.constant 0 : i32
    %c0_i32_1 = arith.constant 0 : i32
    return %c0_i32, %c0_i32_0 : i32, i32
  }
  func.func @transform_2(%arg0: i32, %arg1: i32) -> (i32, i32) {
    %c0_i32 = arith.constant 0 : i32
    %c0_i32_0 = arith.constant 0 : i32
    %c0_i32_1 = arith.constant 0 : i32
    return %c0_i32, %c0_i32_0 : i32, i32
  }
  func.func @transform_3(%arg0: i32, %arg1: i32) -> (i32, i32) {
    %c0_i32 = arith.constant 0 : i32
    %c0_i32_0 = arith.constant 0 : i32
    %c0_i32_1 = arith.constant 0 : i32
    return %c0_i32, %c0_i32_0 : i32, i32
  }
  func.func @transform_4(%arg0: i32, %arg1: i32) -> (i32, i32, i32) {
    %c0_i32 = arith.constant 0 : i32
    %c0_i32_0 = arith.constant 0 : i32
    %c0_i32_1 = arith.constant 0 : i32
    %c0_i32_2 = arith.constant 0 : i32
    return %c0_i32, %c0_i32_0, %c0_i32_1 : i32, i32, i32
  }
  func.func @transform_5(%arg0: i32, %arg1: i32) -> (i32, i32, i32) {
    %c0_i32 = arith.constant 0 : i32
    %c0_i32_0 = arith.constant 0 : i32
    return %arg0, %c0_i32, %arg1 : i32, i32, i32
  }
  func.func @transform_6(%arg0: i32, %arg1: i32) -> (i32, i32, i32) {
    %c0_i32 = arith.constant 0 : i32
    %c0_i32_0 = arith.constant 0 : i32
    %c0_i32_1 = arith.constant 0 : i32
    return %arg0, %c0_i32, %c0_i32_0 : i32, i32, i32
  }
}

</mosaic_0001>

<llo_original>
// kernel: tpu_custom_call.1
$region0: #{tpu_custom_call.1}
  #allocation0 [shape = 'u32[]', space=smem, size = 0x4, offset = 0x4, fixed_abs, tag = 'smem constant byte address 0x4 - core index']
  #allocation1 [shape = 'u32[72,128]{1,0:T(1,128)}', space=vmem, size = 0x9000, scoped, tag = 'internal scratch']
  %s0 = inlined_call_operand.hbm [shape: f32[2,3,8,256], index: 0, kind: input, shape index: {}]
  %s1 = inlined_call_operand.vmem [shape: f32[8,8], index: 1, kind: input, shape index: {}]
  %s2 = inlined_call_operand.vmem [shape: f32[8,1], index: 2, kind: input, shape index: {}]
  %s3 = inlined_call_operand.hbm [shape: f32[8,8], index: 3, kind: input, shape index: {}]
  %s4 = inlined_call_operand.hbm [shape: f32[3,8,8], index: 4, kind: input, shape index: {}]
  %s5 = inlined_call_operand.hbm [shape: f32[2,8,256], index: 5, kind: output, shape index: {0}]
  %s6 = inlined_call_operand.vmem [shape: f32[2,8,3], index: 6, kind: output, shape index: {1}]
  %7 = xla_tuple %s5, %s6
  %s8 = sld [smem:[#allocation0]]
  $region77: #{tpu_custom_call.1} parent=0
    _
  %s10 = ssub.s32 1, %s8
  %s11 = scalar_select 0, %s10, %s8
  $region1: #{tpu_custom_call.1} parent=0
    #allocation2 [shape = 'u8[49152]{0}', space=vmem, size = 0xc000, scoped, tag = 'input window, operand 0']
    #allocation3 [shape = 's32[2]{0}', space=sflag, size = 0x8, scoped, tag = 'scoped memory for tpu_custom_call.1']
    #allocation4 [shape = 's32[2]{0}', space=sflag, size = 0x8, scoped, tag = 'scoped memory for tpu_custom_call.1']
    #allocation5 [shape = 'u8[4096]{0}', space=vmem, size = 0x1000, scoped, tag = 'input window, operand 3, single buffered']
    #allocation6 [shape = 's32[1]{0}', space=sflag, size = 0x4, scoped, tag = 'scoped memory for tpu_custom_call.1']
    #allocation7 [shape = 'u8[12288]{0}', space=vmem, size = 0x3000, scoped, tag = 'input window, operand 4, single buffered']
    #allocation8 [shape = 'u8[16384]{0}', space=vmem, size = 0x4000, scoped, tag = 'output window, operand 0']
    %12 = vsyncpa [#allocation3], 0
    %s13 = scalar_lea.sflag [#allocation3], 1
    %14 = vsyncpa %s13, 0
    %15 = vsyncpa [#allocation6], 0
    %16 = vsyncpa [#allocation4], 0
    %s17 = scalar_lea.sflag [#allocation4], 1
    %18 = vsyncpa %s17, 0
    loop: start=0, step=1, limit=4
    $region2: #{tpu_custom_call.1} parent=1 // loop_pre_header
      _
    $region3: #{tpu_custom_call.1} parent=1 // loop_header
      %s20 = sphi 0, %s24
      %p21 = scmp.ge.s32.totalorder %s20, 4
      %s27 = sphi 0, %s39
      %s28 = sphi 0, %s35
      %s29 = sphi 0, %s27
      %s30 = sphi 0, %s28
      %s31 = sphi 0, %s29
      %s32 = sphi 0, %s30
      %s44 = sphi 0, %s46
      %s47 = sphi 0, %s44
      %s48 = sphi 0, %s47
      %s64 = sphi 0, %s48
      %s68 = sphi 0, %s68
      %s70 = sphi 0, %s68
      %s71 = sphi 0, %s70
      %s85 = sphi 0, %s71
      %s89 = sphi 0, %s89
      %s91 = sphi 0, %s89
      %s92 = sphi 0, %s91
      %s106 = sphi 0, %s92
      %s110 = sphi 0, %s110
      %s112 = sphi 0, %s110
      %s113 = sphi 0, %s112
      %s127 = sphi 0, %s113
      %s131 = sphi 0, %s131
      %s133 = sphi 0, %s131
      %s134 = sphi 0, %s133
      %s148 = sphi 0, %s134
      %s156 = sphi 0, %s158
      %s159 = sphi 0, %s156
      %s160 = sphi 0, %s159
      %s176 = sphi 0, %s160
      %s182 = sphi 0, %s184
      %s185 = sphi 0, %s182
      %s186 = sphi 0, %s185
      %s202 = sphi 0, %s186
    $region4: #{tpu_custom_call.1} parent=1 // loop_header_branch
      %23 = sbr.rel (%p21) target = $region8
    $region5: #{tpu_custom_call.1} parent=1 // loop_body
      %s25 = ssub.s32 %s20, 1
      %s26 = ssub.s32 %s20, 2
      %s33 = sadd.s32 1, %s28
      %p34 = scmp.ge.s32.totalorder %s33, 1
      %s35 = scalar_select %p34, 0, %s33
      %s36 = sadd.s32 1, %s27
      %s37 = scalar_select %p34, %s36, %s27
      %p38 = scmp.ge.s32.totalorder %s37, 2
      %s39 = scalar_select %p38, 0, %s37
      %s40 = ssub.s32 %s27, %s39
      %s41 = ssub.s32 %s28, %s35
      %s42 = sor.u32 %s40, %s41
      %p43 = scmp.eq.s32.totalorder %s42, 0
      %s45 = sadd.s32 %s44, 1
      %s46 = scalar_select %p43, %s44, %s45
      %p49 = pneg %p43
      %p50 = scmp.eq.s32.totalorder %s20, 1
      %p51 = por %p49, %p50
      %p52 = scmp.ne.s32.totalorder %s44, %s47
      %p53 = scmp.eq.s32.totalorder %s20, 0
      %p54 = por %p52, %p53
      %p55 = scmp.ne.s32.totalorder %s44, %s47
      %p56 = scmp.eq.s32.totalorder %s25, 1
      %p57 = por %p55, %p56
      %p58 = scmp.ne.s32.totalorder %s47, %s48
      %p59 = scmp.eq.s32.totalorder %s25, 0
      %p60 = por %p58, %p59
      %p61 = scmp.ne.s32.totalorder %s47, %s48
      %p62 = scmp.eq.s32.totalorder %s26, 1
      %p63 = por %p61, %p62
      %p65 = scmp.ne.s32.totalorder %s48, %s64
      %p66 = scmp.eq.s32.totalorder %s26, 0
      %p67 = por %p65, %p66
      %s69 = sadd.s32 %s68, 1
      %p72 = scmp.eq.s32.totalorder %s20, 1
      %p73 = scmp.ne.s32.totalorder %s68, %s70
      %p74 = scmp.eq.s32.totalorder %s20, 0
      %p75 = por %p73, %p74
      %p76 = scmp.ne.s32.totalorder %s68, %s70
      %p77 = scmp.eq.s32.totalorder %s25, 1
      %p78 = por %p76, %p77
      %p79 = scmp.ne.s32.totalorder %s70, %s71
      %p80 = scmp.eq.s32.totalorder %s25, 0
      %p81 = por %p79, %p80
      %p82 = scmp.ne.s32.totalorder %s70, %s71
      %p83 = scmp.eq.s32.totalorder %s26, 1
      %p84 = por %p82, %p83
      %p86 = scmp.ne.s32.totalorder %s71, %s85
      %p87 = scmp.eq.s32.totalorder %s26, 0
      %p88 = por %p86, %p87
      %s90 = sadd.s32 %s89, 1
      %p93 = scmp.eq.s32.totalorder %s20, 1
      %p94 = scmp.ne.s32.totalorder %s89, %s91
      %p95 = scmp.eq.s32.totalorder %s20, 0
      %p96 = por %p94, %p95
      %p97 = scmp.ne.s32.totalorder %s89, %s91
      %p98 = scmp.eq.s32.totalorder %s25, 1
      %p99 = por %p97, %p98
      %p100 = scmp.ne.s32.totalorder %s91, %s92
      %p101 = scmp.eq.s32.totalorder %s25, 0
      %p102 = por %p100, %p101
      %p103 = scmp.ne.s32.totalorder %s91, %s92
      %p104 = scmp.eq.s32.totalorder %s26, 1
      %p105 = por %p103, %p104
      %p107 = scmp.ne.s32.totalorder %s92, %s106
      %p108 = scmp.eq.s32.totalorder %s26, 0
      %p109 = por %p107, %p108
      %s111 = sadd.s32 %s110, 1
      %p114 = scmp.eq.s32.totalorder %s20, 1
      %p115 = scmp.ne.s32.totalorder %s110, %s112
      %p116 = scmp.eq.s32.totalorder %s20, 0
      %p117 = por %p115, %p116
      %p118 = scmp.ne.s32.totalorder %s110, %s112
      %p119 = scmp.eq.s32.totalorder %s25, 1
      %p120 = por %p118, %p119
      %p121 = scmp.ne.s32.totalorder %s112, %s113
      %p122 = scmp.eq.s32.totalorder %s25, 0
      %p123 = por %p121, %p122
      %p124 = scmp.ne.s32.totalorder %s112, %s113
      %p125 = scmp.eq.s32.totalorder %s26, 1
      %p126 = por %p124, %p125
      %p128 = scmp.ne.s32.totalorder %s113, %s127
      %p129 = scmp.eq.s32.totalorder %s26, 0
      %p130 = por %p128, %p129
      %s132 = sadd.s32 %s131, 1
      %p135 = scmp.eq.s32.totalorder %s20, 1
      %p136 = scmp.ne.s32.totalorder %s131, %s133
      %p137 = scmp.eq.s32.totalorder %s20, 0
      %p138 = por %p136, %p137
      %p139 = scmp.ne.s32.totalorder %s131, %s133
      %p140 = scmp.eq.s32.totalorder %s25, 1
      %p141 = por %p139, %p140
      %p142 = scmp.ne.s32.totalorder %s133, %s134
      %p143 = scmp.eq.s32.totalorder %s25, 0
      %p144 = por %p142, %p143
      %p145 = scmp.ne.s32.totalorder %s133, %s134
      %p146 = scmp.eq.s32.totalorder %s26, 1
      %p147 = por %p145, %p146
      %p149 = scmp.ne.s32.totalorder %s134, %s148
      %p150 = scmp.eq.s32.totalorder %s26, 0
      %p151 = por %p149, %p150
      %s152 = ssub.s32 %s27, %s39
      %s153 = ssub.s32 %s28, %s35
      %s154 = sor.u32 %s152, %s153
      %p155 = scmp.eq.s32.totalorder %s154, 0
      %s157 = sadd.s32 %s156, 1
      %s158 = scalar_select %p155, %s156, %s157
      %p161 = pneg %p155
      %p162 = scmp.eq.s32.totalorder %s20, 1
      %p163 = por %p161, %p162
      %p164 = scmp.ne.s32.totalorder %s156, %s159
      %p165 = scmp.eq.s32.totalorder %s20, 0
      %p166 = por %p164, %p165
      %p167 = scmp.ne.s32.totalorder %s156, %s159
      %p168 = scmp.eq.s32.totalorder %s25, 1
      %p169 = por %p167, %p168
      %p170 = scmp.ne.s32.totalorder %s159, %s160
      %p171 = scmp.eq.s32.totalorder %s25, 0
      %p172 = por %p170, %p171
      %p173 = scmp.ne.s32.totalorder %s159, %s160
      %p174 = scmp.eq.s32.totalorder %s26, 1
      %p175 = por %p173, %p174
      %p177 = scmp.ne.s32.totalorder %s160, %s176
      %p178 = scmp.eq.s32.totalorder %s26, 0
      %p179 = por %p177, %p178
      %s180 = ssub.s32 %s27, %s39
      %p181 = scmp.eq.s32.totalorder %s180, 0
      %s183 = sadd.s32 %s182, 1
      %s184 = scalar_select %p181, %s182, %s183
      %p187 = pneg %p181
      %p188 = scmp.eq.s32.totalorder %s20, 1
      %p189 = por %p187, %p188
      %p190 = scmp.ne.s32.totalorder %s182, %s185
      %p191 = scmp.eq.s32.totalorder %s20, 0
      %p192 = por %p190, %p191
      %p193 = scmp.ne.s32.totalorder %s182, %s185
      %p194 = scmp.eq.s32.totalorder %s25, 1
      %p195 = por %p193, %p194
      %p196 = scmp.ne.s32.totalorder %s185, %s186
      %p197 = scmp.eq.s32.totalorder %s25, 0
      %p198 = por %p196, %p197
      %p199 = scmp.ne.s32.totalorder %s185, %s186
      %p200 = scmp.eq.s32.totalorder %s26, 1
      %p201 = por %p199, %p200
      %p203 = scmp.ne.s32.totalorder %s186, %s202
      %p204 = scmp.eq.s32.totalorder %s26, 0
      %p205 = por %p203, %p204
      %p206 = scmp.le.s32.totalorder 1, %s20
      %p207 = scmp.lt.s32.totalorder %s20, 3
      %p208 = pnand %p206, %p207
      %p209 = pneg %p208
      // Predicated region
      $region9: #{tpu_custom_call.1} parent=5 // pred_check
        _
      $region10: #{tpu_custom_call.1} parent=5 // pred_check_branch
        %211 = sbr.rel (%p208) target = $region12
      $region11: #{tpu_custom_call.1} parent=5 // pred_region
        %s212 = ssub.s32 %s20, 1
        // Predicated region
        $region13: #{tpu_custom_call.1} parent=11 // pred_check
          %p213 = pneg %p81
        $region14: #{tpu_custom_call.1} parent=11 // pred_check_branch
          %215 = sbr.rel (%p213) target = $region16
        $region15: #{tpu_custom_call.1} parent=11 // pred_region
          _
        $region16: #{tpu_custom_call.1} parent=11 // pred_fallthru
          _
        // Predicated region
        $region17: #{tpu_custom_call.1} parent=11 // pred_check
          %p216 = pneg %p102
        $region18: #{tpu_custom_call.1} parent=11 // pred_check_branch
          %218 = sbr.rel (%p216) target = $region20
        $region19: #{tpu_custom_call.1} parent=11 // pred_region
          _
        $region20: #{tpu_custom_call.1} parent=11 // pred_fallthru
          _
        // Predicated region
        $region21: #{tpu_custom_call.1} parent=11 // pred_check
          %p219 = pneg %p123
        $region22: #{tpu_custom_call.1} parent=11 // pred_check_branch
          %221 = sbr.rel (%p219) target = $region24
        $region23: #{tpu_custom_call.1} parent=11 // pred_region
          %223 = vsyncadd [#allocation6], 0
          %s225 = sshll.u32 %s3, 4
          %s226 = int_to_ptr.hbm [resolvable:$true] %s225
          %s227 = sshll.u32 [#allocation5], 4
          %s228 = int_to_ptr.vmem [resolvable:$true] %s227
          %230 = dma.hbm_to_vmem [thread:$0]  %s226, 128, %s228, [#allocation6]
        $region24: #{tpu_custom_call.1} parent=11 // pred_fallthru
          _
        // Predicated region
        $region25: #{tpu_custom_call.1} parent=11 // pred_check
          %p231 = pneg %p144
        $region26: #{tpu_custom_call.1} parent=11 // pred_check_branch
          %233 = sbr.rel (%p231) target = $region28
        $region27: #{tpu_custom_call.1} parent=11 // pred_region
          %235 = vsyncadd [#allocation6], 0
          %s236 = sshll.u32 %s4, 4
          %s237 = int_to_ptr.hbm [resolvable:$true] %s236
          %s238 = sshll.u32 [#allocation7], 4
          %s239 = int_to_ptr.vmem [resolvable:$true] %s238
          %244 = dma.hbm_to_vmem [thread:$0]  %s237, 384, %s239, [#allocation6], 128, 128, 8
        $region28: #{tpu_custom_call.1} parent=11 // pred_fallthru
          _
      $region12: #{tpu_custom_call.1} parent=5 // pred_fallthru
        _
      %p245 = scmp.lt.s32.totalorder %s20, 2
      // Predicated region
      $region29: #{tpu_custom_call.1} parent=5 // pred_check
        %p246 = pneg %p245
      $region30: #{tpu_custom_call.1} parent=5 // pred_check_branch
        %248 = sbr.rel (%p246) target = $region32
      $region31: #{tpu_custom_call.1} parent=5 // pred_region
        // Predicated region
        $region33: #{tpu_custom_call.1} parent=31 // pred_check
          %p249 = pneg %p54
        $region34: #{tpu_custom_call.1} parent=31 // pred_check_branch
          %251 = sbr.rel (%p249) target = $region36
        $region35: #{tpu_custom_call.1} parent=31 // pred_region
          %s252 = sand.u32 %s44, 1
          %s253 = scalar_lea.sflag [#allocation3], %s252
          %s254 = sand.u32 %s44, 1
          %s255 = smul.addr %s254, 48
          %s256 = scalar_lea.vmem [#allocation2], %s255
          %s257 = smul.u32 2, %s28
          %259 = vsyncadd %s253, 0
          %s260 = smul.addr %s27, 6
          %s261 = sadd.s32 %s257, %s260
          %s262 = smul.addr %s261, 8
          %s263 = scalar_lea.hbm %s0, %s262
          %s264 = sshll.u32 %s263, 4
          %s265 = int_to_ptr.hbm [resolvable:$true] %s264
          %s266 = sshll.u32 %s256, 4
          %s267 = int_to_ptr.vmem [resolvable:$true] %s266
          %272 = dma.hbm_to_vmem [thread:$0]  %s265, 768, %s267, %s253, 256, 256, 16
        $region36: #{tpu_custom_call.1} parent=31 // pred_fallthru
          _
      $region32: #{tpu_custom_call.1} parent=5 // pred_fallthru
        _
      %p273 = scmp.le.s32.totalorder 1, %s20
      %p274 = scmp.lt.s32.totalorder %s20, 3
      %p275 = pnand %p273, %p274
      %p276 = pneg %p275
      // Predicated region
      $region37: #{tpu_custom_call.1} parent=5 // pred_check
        _
      $region38: #{tpu_custom_call.1} parent=5 // pred_check_branch
        %278 = sbr.rel (%p275) target = $region40
      $region39: #{tpu_custom_call.1} parent=5 // pred_region
        %s279 = ssub.s32 %s20, 1
        %s280 = sand.u32 %s47, 1
        %s281 = scalar_lea.sflag [#allocation3], %s280
        %s282 = sand.u32 %s47, 1
        %s283 = smul.addr %s282, 48
        %s284 = scalar_lea.vmem [#allocation2], %s283
        // Predicated region
        $region41: #{tpu_custom_call.1} parent=39 // pred_check
          %p285 = pneg %p60
        $region42: #{tpu_custom_call.1} parent=39 // pred_check_branch
          %287 = sbr.rel (%p285) target = $region44
        $region43: #{tpu_custom_call.1} parent=39 // pred_region
          %289 = dma.done %s281, 768
        $region44: #{tpu_custom_call.1} parent=39 // pred_fallthru
          _
        // Predicated region
        $region45: #{tpu_custom_call.1} parent=39 // pred_check
          %p290 = pneg %p123
        $region46: #{tpu_custom_call.1} parent=39 // pred_check_branch
          %292 = sbr.rel (%p290) target = $region48
        $region47: #{tpu_custom_call.1} parent=39 // pred_region
          %294 = dma.done [#allocation6], 128
        $region48: #{tpu_custom_call.1} parent=39 // pred_fallthru
          _
        // Predicated region
        $region49: #{tpu_custom_call.1} parent=39 // pred_check
          %p295 = pneg %p144
        $region50: #{tpu_custom_call.1} parent=39 // pred_check_branch
          %297 = sbr.rel (%p295) target = $region52
        $region51: #{tpu_custom_call.1} parent=39 // pred_region
          %299 = dma.done [#allocation6], 384
        $region52: #{tpu_custom_call.1} parent=39 // pred_fallthru
          _
        %s300 = sand.u32 %s47, 1
        %s301 = scalar_lea.sflag [#allocation3], %s300
        %s302 = sand.u32 %s47, 1
        %s303 = smul.addr %s302, 48
        %s304 = scalar_lea.vmem [#allocation2], %s303
        %p305 = pneg %p60
        %p306 = pneg %p57
        %p307 = pneg %p81
        %p308 = pneg %p78
        %p309 = pneg %p102
        %p310 = pneg %p99
        %p311 = pneg %p123
        %p312 = pneg %p120
        %p313 = pneg %p144
        %p314 = pneg %p141
        %p315 = pneg %p172
        %p316 = pneg %p169
        %s317 = sand.u32 %s159, 1
        %s318 = scalar_lea.sflag [#allocation4], %s317
        %s319 = sand.u32 %s159, 1
        %s320 = smul.addr %s319, 16
        %s321 = scalar_lea.vmem [#allocation8], %s320
        %p322 = pneg %p198
        %p323 = pneg %p195
        %p324 = scmp.lt.s32.totalorder %s29, 1
        %s325 = scalar_select %p324, %s29, 1
        %s326 = smul.addr %s325, 8
        %s327 = scalar_lea.vmem %s6, %s326
        %s328 = smul.u32 2, %s30
        %s329 = smul.u32 2, %s30
        %p330 = scmp.lt.s32.totalorder %s29, 1
        %s331 = scalar_select %p330, %s29, 1
        %s332 = smul.addr %s331, 8
        %s333 = scalar_lea.vmem %s6, %s332
        %p334 = scmp.eq.s32.totalorder %s30, 0
        // Predicated region
        $region53: #{tpu_custom_call.1} parent=39 // pred_check
          %p335 = pneg %p334
        $region54: #{tpu_custom_call.1} parent=39 // pred_check_branch
          %337 = sbr.rel (%p335) target = $region56
        $region55: #{tpu_custom_call.1} parent=39 // pred_region
          %vm338 = vcmask 23552
          %339 = vst.msk [vmem:[%s333] sm:$0xff] %vm338, -inf
        $region56: #{tpu_custom_call.1} parent=39 // pred_fallthru
          _
        %v340 = vld [vmem:[%s284] sm:$0xff]
        %v341 = vld [vmem:[%s284 + $0x8] sm:$0xff]
        %v342 = vld [vmem:[%s1] sm:$0xff]
        %v343 = vld [vmem:[%s2] sm:$0xff]
        %345 = vset.pattern.permute.xlu0 0
        %346 = vperm.xlu0 %345, %v343
        %v347 = vpop.permute.xlu0 %346
        %vm349 = vcmask 64512
        %v351 = vsel %vm349, %v342, 0
        %353 = vmatpush.msra.mxu0 0.0
        %354 = vmatpush.msra.mxu0 0.0
        %355 = vmatpush.msra.mxu0 0.0
        %356 = vmatpush.msra.mxu0 0.0
        %357 = vmatpush.msra.mxu0 0.0
        %358 = vmatpush.msra.mxu0 0.0
        %359 = vmatpush.msra.mxu0 0.0
        %360 = vmatpush.msra.mxu0 0.0
        %361 = vmatpush.msra.mxu0 0.0
        %362 = vmatpush.msra.mxu0 0.0
        %363 = vmatpush.msra.mxu0 0.0
        %364 = vmatpush.msra.mxu0 0.0
        %365 = vmatpush.msra.mxu0 0.0
        %366 = vmatpush.msra.mxu0 0.0
        %367 = vmatpush.msra.mxu0 0.0
        %368 = vmatpush.msra.mxu0 %v340
        %369 = vmatmul.f32.gmra.mxu0 %v351
        %v370 = vpop.f32.mrf.mxu0
        %v371 = vadd.f32 %v347, %v370
        %372 = vdwg.mxu0
        %373 = vmatpush.msra.mxu0 0.0
        %374 = vmatpush.msra.mxu0 0.0
        %375 = vmatpush.msra.mxu0 0.0
        %376 = vmatpush.msra.mxu0 0.0
        %377 = vmatpush.msra.mxu0 0.0
        %378 = vmatpush.msra.mxu0 0.0
        %379 = vmatpush.msra.mxu0 0.0
        %380 = vmatpush.msra.mxu0 0.0
        %381 = vmatpush.msra.mxu0 0.0
        %382 = vmatpush.msra.mxu0 0.0
        %383 = vmatpush.msra.mxu0 0.0
        %384 = vmatpush.msra.mxu0 0.0
        %385 = vmatpush.msra.mxu0 0.0
        %386 = vmatpush.msra.mxu0 0.0
        %387 = vmatpush.msra.mxu0 0.0
        %388 = vmatpush.msra.mxu0 %v341
        %389 = vmatmul.f32.gmra.mxu0 %v351
        %v390 = vpop.f32.mrf.mxu0
        %v391 = vadd.f32 %v347, %v390
        %392 = vdwg.mxu0
        %v393 = vmax.f32 %v371, 0.0
        %v394 = vmax.f32 %v391, 0.0
        %v395 = vld [vmem:[#allocation5] sm:$0xff]
        %v397 = vsel %vm349, %v395, 0
        %399 = vmatpush.msra.mxu0 0.0
        %400 = vmatpush.msra.mxu0 0.0
        %401 = vmatpush.msra.mxu0 0.0
        %402 = vmatpush.msra.mxu0 0.0
        %403 = vmatpush.msra.mxu0 0.0
        %404 = vmatpush.msra.mxu0 0.0
        %405 = vmatpush.msra.mxu0 0.0
        %406 = vmatpush.msra.mxu0 0.0
        %407 = vmatpush.msra.mxu0 0.0
        %408 = vmatpush.msra.mxu0 0.0
        %409 = vmatpush.msra.mxu0 0.0
        %410 = vmatpush.msra.mxu0 0.0
        %411 = vmatpush.msra.mxu0 0.0
        %412 = vmatpush.msra.mxu0 0.0
        %413 = vmatpush.msra.mxu0 0.0
        %414 = vmatpush.msra.mxu0 %v393
        %415 = vmatmul.f32.gmra.mxu0 %v397
        %v416 = vpop.f32.mrf.mxu0
        %v417 = vadd.f32 0.0, %v416
        %418 = vdwg.mxu0
        %419 = vmatpush.msra.mxu0 0.0
        %420 = vmatpush.msra.mxu0 0.0
        %421 = vmatpush.msra.mxu0 0.0
        %422 = vmatpush.msra.mxu0 0.0
        %423 = vmatpush.msra.mxu0 0.0
        %424 = vmatpush.msra.mxu0 0.0
        %425 = vmatpush.msra.mxu0 0.0
        %426 = vmatpush.msra.mxu0 0.0
        %427 = vmatpush.msra.mxu0 0.0
        %428 = vmatpush.msra.mxu0 0.0
        %429 = vmatpush.msra.mxu0 0.0
        %430 = vmatpush.msra.mxu0 0.0
        %431 = vmatpush.msra.mxu0 0.0
        %432 = vmatpush.msra.mxu0 0.0
        %433 = vmatpush.msra.mxu0 0.0
        %434 = vmatpush.msra.mxu0 %v394
        %435 = vmatmul.f32.gmra.mxu0 %v397
        %v436 = vpop.f32.mrf.mxu0
        %v437 = vadd.f32 0.0, %v436
        %438 = vdwg.mxu0
        %v439 = vmax.f32 %v417, %v437
        %440 = vmax.xlane.f32.xlu0 %v439
        %v441 = vpop.xlane.xlu0 %440
        %v442 = vld [vmem:[%s333] sm:$0xff]
        %v443 = vmax.f32 %v442, %v441
        %vm444 = vcmask 7168
        %445 = vst.msk [vmem:[%s333] sm:$0xff] %vm444, %v443
        %v446 = vld [vmem:[#allocation7] sm:$0xff]
        %s447 = scalar_lea.vmem %s284, 16 [#allocation2]
        %v448 = vld [vmem:[%s447] sm:$0xff]
        %v449 = vld [vmem:[%s447 + $0x8] sm:$0xff]
        %v450 = vld [vmem:[%s1] sm:$0xff]
        %v451 = vld [vmem:[%s2] sm:$0xff]
        %453 = vset.pattern.permute.xlu0 0
        %454 = vperm.xlu0 %453, %v451
        %v455 = vpop.permute.xlu0 %454
        %v458 = vsel %vm349, %v450, 0
        %460 = vmatpush.msra.mxu0 0.0
        %461 = vmatpush.msra.mxu0 0.0
        %462 = vmatpush.msra.mxu0 0.0
        %463 = vmatpush.msra.mxu0 0.0
        %464 = vmatpush.msra.mxu0 0.0
        %465 = vmatpush.msra.mxu0 0.0
        %466 = vmatpush.msra.mxu0 0.0
        %467 = vmatpush.msra.mxu0 0.0
        %468 = vmatpush.msra.mxu0 0.0
        %469 = vmatpush.msra.mxu0 0.0
        %470 = vmatpush.msra.mxu0 0.0
        %471 = vmatpush.msra.mxu0 0.0
        %472 = vmatpush.msra.mxu0 0.0
        %473 = vmatpush.msra.mxu0 0.0
        %474 = vmatpush.msra.mxu0 0.0
        %475 = vmatpush.msra.mxu0 %v448
        %476 = vmatmul.f32.gmra.mxu0 %v458
        %v477 = vpop.f32.mrf.mxu0
        %v478 = vadd.f32 %v455, %v477
        %479 = vdwg.mxu0
        %480 = vmatpush.msra.mxu0 0.0
        %481 = vmatpush.msra.mxu0 0.0
        %482 = vmatpush.msra.mxu0 0.0
        %483 = vmatpush.msra.mxu0 0.0
        %484 = vmatpush.msra.mxu0 0.0
        %485 = vmatpush.msra.mxu0 0.0
        %486 = vmatpush.msra.mxu0 0.0
        %487 = vmatpush.msra.mxu0 0.0
        %488 = vmatpush.msra.mxu0 0.0
        %489 = vmatpush.msra.mxu0 0.0
        %490 = vmatpush.msra.mxu0 0.0
        %491 = vmatpush.msra.mxu0 0.0
        %492 = vmatpush.msra.mxu0 0.0
        %493 = vmatpush.msra.mxu0 0.0
        %494 = vmatpush.msra.mxu0 0.0
        %495 = vmatpush.msra.mxu0 %v449
        %496 = vmatmul.f32.gmra.mxu0 %v458
        %v497 = vpop.f32.mrf.mxu0
        %v498 = vadd.f32 %v455, %v497
        %499 = vdwg.mxu0
        %v500 = vmax.f32 %v478, 0.0
        %v501 = vmax.f32 %v498, 0.0
        %v502 = vld [vmem:[#allocation5] sm:$0xff]
        %v504 = vsel %vm349, %v502, 0
        %506 = vmatpush.msra.mxu0 0.0
        %507 = vmatpush.msra.mxu0 0.0
        %508 = vmatpush.msra.mxu0 0.0
        %509 = vmatpush.msra.mxu0 0.0
        %510 = vmatpush.msra.mxu0 0.0
        %511 = vmatpush.msra.mxu0 0.0
        %512 = vmatpush.msra.mxu0 0.0
        %513 = vmatpush.msra.mxu0 0.0
        %514 = vmatpush.msra.mxu0 0.0
        %515 = vmatpush.msra.mxu0 0.0
        %516 = vmatpush.msra.mxu0 0.0
        %517 = vmatpush.msra.mxu0 0.0
        %518 = vmatpush.msra.mxu0 0.0
        %519 = vmatpush.msra.mxu0 0.0
        %520 = vmatpush.msra.mxu0 0.0
        %521 = vmatpush.msra.mxu0 %v500
        %522 = vmatmul.f32.gmra.mxu0 %v504
        %v523 = vpop.f32.mrf.mxu0
        %v524 = vadd.f32 0.0, %v523
        %525 = vdwg.mxu0
        %526 = vmatpush.msra.mxu0 0.0
        %527 = vmatpush.msra.mxu0 0.0
        %528 = vmatpush.msra.mxu0 0.0
        %529 = vmatpush.msra.mxu0 0.0
        %530 = vmatpush.msra.mxu0 0.0
        %531 = vmatpush.msra.mxu0 0.0
        %532 = vmatpush.msra.mxu0 0.0
        %533 = vmatpush.msra.mxu0 0.0
        %534 = vmatpush.msra.mxu0 0.0
        %535 = vmatpush.msra.mxu0 0.0
        %536 = vmatpush.msra.mxu0 0.0
        %537 = vmatpush.msra.mxu0 0.0
        %538 = vmatpush.msra.mxu0 0.0
        %539 = vmatpush.msra.mxu0 0.0
        %540 = vmatpush.msra.mxu0 0.0
        %541 = vmatpush.msra.mxu0 %v501
        %542 = vmatmul.f32.gmra.mxu0 %v504
        %v543 = vpop.f32.mrf.mxu0
        %v544 = vadd.f32 0.0, %v543
        %545 = vdwg.mxu0
        %v546 = vmax.f32 %v524, %v544
        %547 = vmax.xlane.f32.xlu0 %v546
        %v548 = vpop.xlane.xlu0 %547
        %v549 = vld [vmem:[%s333] sm:$0xff]
        %v550 = vmax.f32 %v549, %v548
        %vm551 = vcmask 15368
        %552 = vst.msk [vmem:[%s333] sm:$0xff] %vm551, %v550
        %s553 = scalar_lea.vmem [#allocation7], 8
        %v554 = vld [vmem:[%s553] sm:$0xff]
        %v556 = vsel %vm349, %v554, 0
        %558 = vmatpush.msra.mxu0 0.0
        %559 = vmatpush.msra.mxu0 0.0
        %560 = vmatpush.msra.mxu0 0.0
        %561 = vmatpush.msra.mxu0 0.0
        %562 = vmatpush.msra.mxu0 0.0
        %563 = vmatpush.msra.mxu0 0.0
        %564 = vmatpush.msra.mxu0 0.0
        %565 = vmatpush.msra.mxu0 0.0
        %566 = vmatpush.msra.mxu0 0.0
        %567 = vmatpush.msra.mxu0 0.0
        %568 = vmatpush.msra.mxu0 0.0
        %569 = vmatpush.msra.mxu0 0.0
        %570 = vmatpush.msra.mxu0 0.0
        %571 = vmatpush.msra.mxu0 0.0
        %572 = vmatpush.msra.mxu0 0.0
        %573 = vmatpush.msra.mxu0 %v448
        %574 = vmatmul.f32.gmra.mxu0 %v556
        %v575 = vpop.f32.mrf.mxu0
        %v576 = vadd.f32 0.0, %v575
        %577 = vdwg.mxu0
        %578 = vmatpush.msra.mxu0 0.0
        %579 = vmatpush.msra.mxu0 0.0
        %580 = vmatpush.msra.mxu0 0.0
        %581 = vmatpush.msra.mxu0 0.0
        %582 = vmatpush.msra.mxu0 0.0
        %583 = vmatpush.msra.mxu0 0.0
        %584 = vmatpush.msra.mxu0 0.0
        %585 = vmatpush.msra.mxu0 0.0
        %586 = vmatpush.msra.mxu0 0.0
        %587 = vmatpush.msra.mxu0 0.0
        %588 = vmatpush.msra.mxu0 0.0
        %589 = vmatpush.msra.mxu0 0.0
        %590 = vmatpush.msra.mxu0 0.0
        %591 = vmatpush.msra.mxu0 0.0
        %592 = vmatpush.msra.mxu0 0.0
        %593 = vmatpush.msra.mxu0 %v449
        %594 = vmatmul.f32.gmra.mxu0 %v556
        %v595 = vpop.f32.mrf.mxu0
        %v596 = vadd.f32 0.0, %v595
        %597 = vdwg.mxu0
        %v599 = vsel %vm349, %v446, 0
        %601 = vmatpush.msra.mxu0 0.0
        %602 = vmatpush.msra.mxu0 0.0
        %603 = vmatpush.msra.mxu0 0.0
        %604 = vmatpush.msra.mxu0 0.0
        %605 = vmatpush.msra.mxu0 0.0
        %606 = vmatpush.msra.mxu0 0.0
        %607 = vmatpush.msra.mxu0 0.0
        %608 = vmatpush.msra.mxu0 0.0
        %609 = vmatpush.msra.mxu0 0.0
        %610 = vmatpush.msra.mxu0 0.0
        %611 = vmatpush.msra.mxu0 0.0
        %612 = vmatpush.msra.mxu0 0.0
        %613 = vmatpush.msra.mxu0 0.0
        %614 = vmatpush.msra.mxu0 0.0
        %615 = vmatpush.msra.mxu0 0.0
        %616 = vmatpush.msra.mxu0 %v340
        %617 = vmatmul.f32.gmra.mxu0 %v599
        %v618 = vpop.f32.mrf.mxu0
        %v619 = vadd.f32 %v576, %v618
        %620 = vdwg.mxu0
        %621 = vmatpush.msra.mxu0 0.0
        %622 = vmatpush.msra.mxu0 0.0
        %623 = vmatpush.msra.mxu0 0.0
        %624 = vmatpush.msra.mxu0 0.0
        %625 = vmatpush.msra.mxu0 0.0
        %626 = vmatpush.msra.mxu0 0.0
        %627 = vmatpush.msra.mxu0 0.0
        %628 = vmatpush.msra.mxu0 0.0
        %629 = vmatpush.msra.mxu0 0.0
        %630 = vmatpush.msra.mxu0 0.0
        %631 = vmatpush.msra.mxu0 0.0
        %632 = vmatpush.msra.mxu0 0.0
        %633 = vmatpush.msra.mxu0 0.0
        %634 = vmatpush.msra.mxu0 0.0
        %635 = vmatpush.msra.mxu0 0.0
        %636 = vmatpush.msra.mxu0 %v341
        %637 = vmatmul.f32.gmra.mxu0 %v599
        %v638 = vpop.f32.mrf.mxu0
        %v639 = vadd.f32 %v596, %v638
        %640 = vdwg.mxu0
        %s641 = scalar_lea.vmem %s284, 32 [#allocation2]
        %v642 = vld [vmem:[%s641] sm:$0xff]
        %v643 = vld [vmem:[%s641 + $0x8] sm:$0xff]
        %v644 = vld [vmem:[%s1] sm:$0xff]
        %v645 = vld [vmem:[%s2] sm:$0xff]
        %647 = vset.pattern.permute.xlu0 0
        %648 = vperm.xlu0 %647, %v645
        %v649 = vpop.permute.xlu0 %648
        %v652 = vsel %vm349, %v644, 0
        %654 = vmatpush.msra.mxu0 0.0
        %655 = vmatpush.msra.mxu0 0.0
        %656 = vmatpush.msra.mxu0 0.0
        %657 = vmatpush.msra.mxu0 0.0
        %658 = vmatpush.msra.mxu0 0.0
        %659 = vmatpush.msra.mxu0 0.0
        %660 = vmatpush.msra.mxu0 0.0
        %661 = vmatpush.msra.mxu0 0.0
        %662 = vmatpush.msra.mxu0 0.0
        %663 = vmatpush.msra.mxu0 0.0
        %664 = vmatpush.msra.mxu0 0.0
        %665 = vmatpush.msra.mxu0 0.0
        %666 = vmatpush.msra.mxu0 0.0
        %667 = vmatpush.msra.mxu0 0.0
        %668 = vmatpush.msra.mxu0 0.0
        %669 = vmatpush.msra.mxu0 %v642
        %670 = vmatmul.f32.gmra.mxu0 %v652
        %v671 = vpop.f32.mrf.mxu0
        %v672 = vadd.f32 %v649, %v671
        %673 = vdwg.mxu0
        %674 = vmatpush.msra.mxu0 0.0
        %675 = vmatpush.msra.mxu0 0.0
        %676 = vmatpush.msra.mxu0 0.0
        %677 = vmatpush.msra.mxu0 0.0
        %678 = vmatpush.msra.mxu0 0.0
        %679 = vmatpush.msra.mxu0 0.0
        %680 = vmatpush.msra.mxu0 0.0
        %681 = vmatpush.msra.mxu0 0.0
        %682 = vmatpush.msra.mxu0 0.0
        %683 = vmatpush.msra.mxu0 0.0
        %684 = vmatpush.msra.mxu0 0.0
        %685 = vmatpush.msra.mxu0 0.0
        %686 = vmatpush.msra.mxu0 0.0
        %687 = vmatpush.msra.mxu0 0.0
        %688 = vmatpush.msra.mxu0 0.0
        %689 = vmatpush.msra.mxu0 %v643
        %690 = vmatmul.f32.gmra.mxu0 %v652
        %v691 = vpop.f32.mrf.mxu0
        %v692 = vadd.f32 %v649, %v691
        %693 = vdwg.mxu0
        %v694 = vmax.f32 %v672, 0.0
        %v695 = vmax.f32 %v692, 0.0
        %v696 = vld [vmem:[#allocation5] sm:$0xff]
        %v698 = vsel %vm349, %v696, 0
        %700 = vmatpush.msra.mxu0 0.0
        %701 = vmatpush.msra.mxu0 0.0
        %702 = vmatpush.msra.mxu0 0.0
        %703 = vmatpush.msra.mxu0 0.0
        %704 = vmatpush.msra.mxu0 0.0
        %705 = vmatpush.msra.mxu0 0.0
        %706 = vmatpush.msra.mxu0 0.0
        %707 = vmatpush.msra.mxu0 0.0
        %708 = vmatpush.msra.mxu0 0.0
        %709 = vmatpush.msra.mxu0 0.0
        %710 = vmatpush.msra.mxu0 0.0
        %711 = vmatpush.msra.mxu0 0.0
        %712 = vmatpush.msra.mxu0 0.0
        %713 = vmatpush.msra.mxu0 0.0
        %714 = vmatpush.msra.mxu0 0.0
        %715 = vmatpush.msra.mxu0 %v694
        %716 = vmatmul.f32.gmra.mxu0 %v698
        %v717 = vpop.f32.mrf.mxu0
        %v718 = vadd.f32 0.0, %v717
        %719 = vdwg.mxu0
        %720 = vmatpush.msra.mxu0 0.0
        %721 = vmatpush.msra.mxu0 0.0
        %722 = vmatpush.msra.mxu0 0.0
        %723 = vmatpush.msra.mxu0 0.0
        %724 = vmatpush.msra.mxu0 0.0
        %725 = vmatpush.msra.mxu0 0.0
        %726 = vmatpush.msra.mxu0 0.0
        %727 = vmatpush.msra.mxu0 0.0
        %728 = vmatpush.msra.mxu0 0.0
        %729 = vmatpush.msra.mxu0 0.0
        %730 = vmatpush.msra.mxu0 0.0
        %731 = vmatpush.msra.mxu0 0.0
        %732 = vmatpush.msra.mxu0 0.0
        %733 = vmatpush.msra.mxu0 0.0
        %734 = vmatpush.msra.mxu0 0.0
        %735 = vmatpush.msra.mxu0 %v695
        %736 = vmatmul.f32.gmra.mxu0 %v698
        %v737 = vpop.f32.mrf.mxu0
        %v738 = vadd.f32 0.0, %v737
        %739 = vdwg.mxu0
        %v740 = vmax.f32 %v718, %v738
        %741 = vmax.xlane.f32.xlu0 %v740
        %v742 = vpop.xlane.xlu0 %741
        %v743 = vld [vmem:[%s333] sm:$0xff]
        %v744 = vmax.f32 %v743, %v742
        %vm745 = vcmask 23568
        %746 = vst.msk [vmem:[%s333] sm:$0xff] %vm745, %v744
        %s747 = scalar_lea.vmem [#allocation7], 16
        %v748 = vld [vmem:[%s747] sm:$0xff]
        %v750 = vsel %vm349, %v748, 0
        %752 = vmatpush.msra.mxu0 0.0
        %753 = vmatpush.msra.mxu0 0.0
        %754 = vmatpush.msra.mxu0 0.0
        %755 = vmatpush.msra.mxu0 0.0
        %756 = vmatpush.msra.mxu0 0.0
        %757 = vmatpush.msra.mxu0 0.0
        %758 = vmatpush.msra.mxu0 0.0
        %759 = vmatpush.msra.mxu0 0.0
        %760 = vmatpush.msra.mxu0 0.0
        %761 = vmatpush.msra.mxu0 0.0
        %762 = vmatpush.msra.mxu0 0.0
        %763 = vmatpush.msra.mxu0 0.0
        %764 = vmatpush.msra.mxu0 0.0
        %765 = vmatpush.msra.mxu0 0.0
        %766 = vmatpush.msra.mxu0 0.0
        %767 = vmatpush.msra.mxu0 %v642
        %768 = vmatmul.f32.gmra.mxu0 %v750
        %v769 = vpop.f32.mrf.mxu0
        %v770 = vadd.f32 0.0, %v769
        %771 = vdwg.mxu0
        %772 = vmatpush.msra.mxu0 0.0
        %773 = vmatpush.msra.mxu0 0.0
        %774 = vmatpush.msra.mxu0 0.0
        %775 = vmatpush.msra.mxu0 0.0
        %776 = vmatpush.msra.mxu0 0.0
        %777 = vmatpush.msra.mxu0 0.0
        %778 = vmatpush.msra.mxu0 0.0
        %779 = vmatpush.msra.mxu0 0.0
        %780 = vmatpush.msra.mxu0 0.0
        %781 = vmatpush.msra.mxu0 0.0
        %782 = vmatpush.msra.mxu0 0.0
        %783 = vmatpush.msra.mxu0 0.0
        %784 = vmatpush.msra.mxu0 0.0
        %785 = vmatpush.msra.mxu0 0.0
        %786 = vmatpush.msra.mxu0 0.0
        %787 = vmatpush.msra.mxu0 %v643
        %788 = vmatmul.f32.gmra.mxu0 %v750
        %v789 = vpop.f32.mrf.mxu0
        %v790 = vadd.f32 0.0, %v789
        %791 = vdwg.mxu0
        %v792 = vadd.f32 %v619, %v770
        %v793 = vadd.f32 %v639, %v790
        %794 = vst [vmem:[%s321] sm:$0xff] %v792
        %795 = vst [vmem:[%s321 + $0x8] sm:$0xff] %v793
        %s796 = sand.u32 %s159, 1
        %s797 = scalar_lea.sflag [#allocation4], %s796
        %s798 = sand.u32 %s159, 1
        %s799 = smul.addr %s798, 16
        %s800 = scalar_lea.vmem [#allocation8], %s799
        %p801 = scmp.lt.s32.totalorder %s29, 1
        %s802 = scalar_select %p801, %s29, 1
        %s803 = smul.addr %s802, 8
        %s804 = scalar_lea.vmem %s6, %s803
        // Predicated region
        $region57: #{tpu_custom_call.1} parent=39 // pred_check
          %p805 = pneg %p169
        $region58: #{tpu_custom_call.1} parent=39 // pred_check_branch
          %807 = sbr.rel (%p805) target = $region60
        $region59: #{tpu_custom_call.1} parent=39 // pred_region
          %s808 = smul.u32 2, %s30
          %810 = vsyncadd %s797, 0
          %s811 = smul.addr %s29, 2
          %s812 = sadd.s32 %s808, %s811
          %s813 = smul.addr %s812, 8
          %s814 = scalar_lea.hbm %s5, %s813
          %s816 = sshll.u32 %s800, 4
          %s817 = int_to_ptr.vmem [resolvable:$true] %s816
          %s818 = sshll.u32 %s814, 4
          %s819 = int_to_ptr.hbm [resolvable:$true] %s818
          %821 = dma.vmem_to_hbm [thread:$0]  %s817, 256, %s819, %s797
        $region60: #{tpu_custom_call.1} parent=39 // pred_fallthru
          _
        // Predicated region
        $region61: #{tpu_custom_call.1} parent=39 // pred_check
          %p822 = pneg %p195
        $region62: #{tpu_custom_call.1} parent=39 // pred_check_branch
          %824 = sbr.rel (%p822) target = $region64
        $region63: #{tpu_custom_call.1} parent=39 // pred_region
          _
        $region64: #{tpu_custom_call.1} parent=39 // pred_fallthru
          _
      $region40: #{tpu_custom_call.1} parent=5 // pred_fallthru
        _
      %p825 = scmp.le.s32.totalorder 2, %s20
      // Predicated region
      $region65: #{tpu_custom_call.1} parent=5 // pred_check
        %p826 = pneg %p825
      $region66: #{tpu_custom_call.1} parent=5 // pred_check_branch
        %828 = sbr.rel (%p826) target = $region68
      $region67: #{tpu_custom_call.1} parent=5 // pred_region
        %s829 = ssub.s32 %s20, 2
        // Predicated region
        $region69: #{tpu_custom_call.1} parent=67 // pred_check
          %p830 = pneg %p175
        $region70: #{tpu_custom_call.1} parent=67 // pred_check_branch
          %832 = sbr.rel (%p830) target = $region72
        $region71: #{tpu_custom_call.1} parent=67 // pred_region
          %s833 = sand.u32 %s160, 1
          %s834 = scalar_lea.sflag [#allocation4], %s833
          %s835 = sand.u32 %s160, 1
          %s836 = smul.addr %s835, 16
          %s837 = scalar_lea.vmem [#allocation8], %s836
          %839 = dma.done %s834, 256
        $region72: #{tpu_custom_call.1} parent=67 // pred_fallthru
          _
        // Predicated region
        $region73: #{tpu_custom_call.1} parent=67 // pred_check
          %p840 = pneg %p201
        $region74: #{tpu_custom_call.1} parent=67 // pred_check_branch
          %842 = sbr.rel (%p840) target = $region76
        $region75: #{tpu_custom_call.1} parent=67 // pred_region
          %p843 = scmp.lt.s32.totalorder %s31, 1
          %s844 = scalar_select %p843, %s31, 1
          %s845 = smul.addr %s844, 8
          %s846 = scalar_lea.vmem %s6, %s845
        $region76: #{tpu_custom_call.1} parent=67 // pred_fallthru
          _
      $region68: #{tpu_custom_call.1} parent=5 // pred_fallthru
        _
    $region6: #{tpu_custom_call.1} parent=1 // loop_footer
      %s24 = sadd.s32 1, %s20
    $region7: #{tpu_custom_call.1} parent=1 // loop_footer_branch
      %19 = sbr.rel target = $region3
    $region8: #{tpu_custom_call.1} parent=1 // loop_exit
      _
    %847 = vsyncpa [#allocation3], 1
    %s848 = scalar_lea.sflag [#allocation3], 1
    %849 = vsyncpa %s848, 1
    %850 = vsyncpa [#allocation6], 1
    %851 = vsyncpa [#allocation4], 1
    %s852 = scalar_lea.sflag [#allocation4], 1
    %853 = vsyncpa %s852, 1

</llo_original>
